<compile_context>
chip_gen: v7x
topology: tpu7x:2x2x1
jax: 0.10.0
libtpu: 0.0.40
codegen_flags: <defaults>
</compile_context>

<pallas_src>
from functools import partial

import jax
import jax.numpy as jnp
from jax.experimental import pallas as pl
from jax.experimental.pallas import tpu as pltpu

LANE = 128          # TPU lane width (last-dim granularity)
SUBLANE_BF16 = 16   # bf16 rows per vreg


def _round_up(x, m):
    return (x + m - 1) // m * m


def _mlp_kernel(x_ref, w1_ref, b1_ref, w2_ref, b2_ref, o_ref):
    # x: (TB, in_pad) bf16, w1: (in_pad, hid_pad) bf16, b1: (1, hid_pad) f32,
    # w2: (hid_pad, out_pad) bf16, b2: (1, out_pad) f32, o: (TB, out_pad) f32.
    h = jnp.dot(x_ref[...], w1_ref[...], preferred_element_type=jnp.float32)
    h = jnp.maximum(h + b1_ref[...], 0.0)                      # bias + ReLU in f32 (VPU)
    out = jnp.dot(h.astype(w2_ref.dtype), w2_ref[...],
                  preferred_element_type=jnp.float32)
    o_ref[...] = out + b2_ref[...]                              # lane-dense f32 store


def _affine_kernel(x_ref, w_ref, b_ref, o_ref):
    # Fused path for linear=True (no ReLU): single affine map, one MXU pass.
    out = jnp.dot(x_ref[...], w_ref[...], preferred_element_type=jnp.float32)
    o_ref[...] = out + b_ref[...]


def _pad2(a, rows, cols):
    return jnp.pad(a, ((0, rows - a.shape[0]), (0, cols - a.shape[1])))


@partial(jax.jit, static_argnames=("linear", "block_b"))
def cmnist_forward(x_nchw, w1_t, b1, w2_t, b2, *, linear=False, block_b=1024):
    """Forward pass equivalent to CMnist.forward.

    x_nchw : (B, C, H, W) float32   (C expected 1 for MNIST)
    w1_t   : (H*W*C, 16)  float32   (transpose of nn.Linear weight)
    b1     : (16,)        float32
    w2_t   : (16, out_dim) float32
    b2     : (out_dim,)   float32
    returns (B, out_dim) float32
    """
    B = x_nchw.shape[0]
    feat = x_nchw.reshape(B, -1)                 # torch.flatten(x, start_dim=1)
    in_dim = feat.shape[1]
    hid = w1_t.shape[1]
    out_dim = w2_t.shape[1]

    in_pad = _round_up(in_dim, LANE)
    hid_pad = _round_up(hid, LANE)
    out_pad = _round_up(out_dim, LANE)

    # Batch tile: multiple of 16 rows (bf16 sublane packing). Small batches are
    # padded up to one tile; large batches get a pipelined "parallel" grid.
    tb = max(SUBLANE_BF16,
             min(_round_up(B, SUBLANE_BF16), _round_up(block_b, SUBLANE_BF16)))
    b_padded = _round_up(B, tb)

    # Zero-pad activations (feature dim to lane multiple, batch to tile multiple),
    # cast to bf16 to halve HBM->VMEM traffic; accumulation stays f32.
    feat = _pad2(feat, b_padded, in_pad).astype(jnp.bfloat16)

    grid = (b_padded // tb,)
    x_spec = pl.BlockSpec((tb, in_pad), lambda i: (i, 0))
    out_spec = pl.BlockSpec((tb, out_pad), lambda i: (i, 0))

    def const_spec(shape):
        # Weights/biases: same block every grid step -> fetched once, VMEM-resident.
        return pl.BlockSpec(shape, lambda i: (0, 0))

    cparams = pltpu.CompilerParams(dimension_semantics=("parallel",))

    if linear:
        # No ReLU -> the whole network is a single affine map; fold it in f32
        # (constant-folded under jit for static params) and run one MXU pass per tile.
        w_fold = w1_t @ w2_t                     # (in_dim, out_dim)
        b_fold = b1 @ w2_t + b2                  # (out_dim,)
        w_p = _pad2(w_fold, in_pad, out_pad).astype(jnp.bfloat16)
        b_p = _pad2(b_fold[None, :], 1, out_pad)

        out = pl.pallas_call(
            _affine_kernel,
            out_shape=jax.ShapeDtypeStruct((b_padded, out_pad), jnp.float32),
            grid=grid,
            in_specs=[x_spec, const_spec((in_pad, out_pad)), const_spec((1, out_pad))],
            out_specs=out_spec,
            compiler_params=cparams,
        )(feat, w_p, b_p)
    else:
        w1_p = _pad2(w1_t, in_pad, hid_pad).astype(jnp.bfloat16)
        b1_p = _pad2(b1[None, :], 1, hid_pad)
        w2_p = _pad2(w2_t, hid_pad, out_pad).astype(jnp.bfloat16)
        b2_p = _pad2(b2[None, :], 1, out_pad)

        out = pl.pallas_call(
            _mlp_kernel,
            out_shape=jax.ShapeDtypeStruct((b_padded, out_pad), jnp.float32),
            grid=grid,
            in_specs=[x_spec,
                      const_spec((in_pad, hid_pad)), const_spec((1, hid_pad)),
                      const_spec((hid_pad, out_pad)), const_spec((1, out_pad))],
            out_specs=out_spec,
            compiler_params=cparams,
        )(feat, w1_p, b1_p, w2_p, b2_p)

    # Strip batch/lane padding to restore the (B, out_dim) contract.
    return out[:B, :out_dim]


def _reference(x_nchw, w1_t, b1, w2_t, b2, *, linear=False):
    feat = x_nchw.reshape(x_nchw.shape[0], -1)
    h = feat @ w1_t + b1
    if not linear:
        h = jnp.maximum(h, 0.0)
    return h @ w2_t + b2


if __name__ == "__main__":
    # Config equivalent: image_h = image_w = 16, 10 classes,
    # classic.linear tested both ways.
    H = W = 16
    OUT_DIM = 10
    HID = 16
    B = 4

    key = jax.random.PRNGKey(0)
    kx, k1, k2, k3, k4 = jax.random.split(key, 5)

    x = jax.random.normal(kx, (B, 1, H, W), dtype=jnp.float32)

    # Params match nn.Linear(h*w, 16), nn.Linear(16, out_dim), stored pre-transposed as (in, out).
    w1_t = jax.random.normal(k1, (H * W, HID), dtype=jnp.float32) * 0.05
    b1 = jax.random.normal(k2, (HID,), dtype=jnp.float32) * 0.05
    w2_t = jax.random.normal(k3, (HID, OUT_DIM), dtype=jnp.float32) * 0.05
    b2 = jax.random.normal(k4, (OUT_DIM,), dtype=jnp.float32) * 0.05

    for linear_cfg in (False, True):
        out = cmnist_forward(x, w1_t, b1, w2_t, b2, linear=linear_cfg)
        out = jax.block_until_ready(out)
        ref = _reference(x, w1_t, b1, w2_t, b2, linear=linear_cfg)
        assert out.shape == (B, OUT_DIM), out.shape
        # bf16 inputs/weights with f32 accumulation -> relaxed tolerance vs f32 reference.
        assert jnp.allclose(out, ref, atol=2e-2, rtol=2e-2), \
            f"mismatch vs reference (linear={linear_cfg})"

    print("KERNEL_OK")
</pallas_src>

<mosaic_0001>
module attributes {stable_mosaic.version = 11 : i64} {
  func.func @_mlp_kernel(%arg0: i32, %arg1: memref<16x256xbf16, #tpu.memory_space<vmem>>, %arg2: memref<256x128xbf16, #tpu.memory_space<vmem>>, %arg3: memref<1x128xf32, #tpu.memory_space<vmem>>, %arg4: memref<128x128xbf16, #tpu.memory_space<vmem>>, %arg5: memref<1x128xf32, #tpu.memory_space<vmem>>, %arg6: memref<16x128xf32, #tpu.memory_space<vmem>>) attributes {dimension_semantics = [#tpu.dimension_semantics<parallel>], iteration_bounds = array<i64: 1>, scalar_prefetch = 0 : i64, scratch_operands = 0 : i64, tpu.core_type = #tpu.core_type<tc>, window_params = [{transform_indices = @transform_0, window_bounds = array<i64: 16, 256>}, {pipeline_mode = #tpu.pipeline_mode<synchronous>, transform_indices = @transform_1, window_bounds = array<i64: 256, 128>}, {pipeline_mode = #tpu.pipeline_mode<synchronous>, transform_indices = @transform_2, window_bounds = array<i64: 1, 128>}, {pipeline_mode = #tpu.pipeline_mode<synchronous>, transform_indices = @transform_3, window_bounds = array<i64: 128, 128>}, {pipeline_mode = #tpu.pipeline_mode<synchronous>, transform_indices = @transform_4, window_bounds = array<i64: 1, 128>}, {transform_indices = @transform_5, window_bounds = array<i64: 16, 128>}]} {
    %c0 = arith.constant 0 : index
    %c0_0 = arith.constant 0 : index
    %0 = vector.load %arg1[%c0, %c0_0] : memref<16x256xbf16, #tpu.memory_space<vmem>>, vector<16x256xbf16>
    %c0_1 = arith.constant 0 : index
    %c0_2 = arith.constant 0 : index
    %1 = vector.load %arg2[%c0_1, %c0_2] : memref<256x128xbf16, #tpu.memory_space<vmem>>, vector<256x128xbf16>
    %cst = arith.constant dense<0.000000e+00> : vector<16x128xf32>
    %2 = tpu.matmul %0, %1, %cst {dimension_numbers = #tpu.dot_dimension_numbers<[1], [0], [0], [1], [0, 0, 1, 1], [], []>} : vector<16x256xbf16>, vector<256x128xbf16>, vector<16x128xf32> -> vector<16x128xf32>
    %c0_3 = arith.constant 0 : index
    %c0_4 = arith.constant 0 : index
    %3 = vector.load %arg3[%c0_3, %c0_4] : memref<1x128xf32, #tpu.memory_space<vmem>>, vector<1x128xf32>
    %4 = vector.broadcast %3 : vector<1x128xf32> to vector<16x128xf32>
    %5 = arith.addf %2, %4 : vector<16x128xf32>
    %cst_5 = arith.constant 0.000000e+00 : f32
    %6 = vector.broadcast %cst_5 : f32 to vector<16x128xf32>
    %7 = arith.maximumf %5, %6 : vector<16x128xf32>
    %8 = arith.truncf %7 : vector<16x128xf32> to vector<16x128xbf16>
    %c0_6 = arith.constant 0 : index
    %c0_7 = arith.constant 0 : index
    %9 = vector.load %arg4[%c0_6, %c0_7] : memref<128x128xbf16, #tpu.memory_space<vmem>>, vector<128x128xbf16>
    %cst_8 = arith.constant dense<0.000000e+00> : vector<16x128xf32>
    %10 = tpu.matmul %8, %9, %cst_8 {dimension_numbers = #tpu.dot_dimension_numbers<[1], [0], [0], [1], [0, 0, 1, 1], [], []>} : vector<16x128xbf16>, vector<128x128xbf16>, vector<16x128xf32> -> vector<16x128xf32>
    %c0_9 = arith.constant 0 : index
    %c0_10 = arith.constant 0 : index
    %11 = vector.load %arg5[%c0_9, %c0_10] : memref<1x128xf32, #tpu.memory_space<vmem>>, vector<1x128xf32>
    %12 = vector.broadcast %11 : vector<1x128xf32> to vector<16x128xf32>
    %13 = arith.addf %10, %12 : vector<16x128xf32>
    %c0_11 = arith.constant 0 : index
    %c0_12 = arith.constant 0 : index
    %14 = vector.load %arg6[%c0_11, %c0_12] : memref<16x128xf32, #tpu.memory_space<vmem>>, vector<16x128xf32>
    tpu.vector_store %arg6[%c0_11, %c0_12], %13 {strides = array<i32>} : memref<16x128xf32, #tpu.memory_space<vmem>>, vector<16x128xf32>,
    return
  }
  func.func @transform_0(%arg0: i32) -> (i32, i32) {
    %c0_i32 = arith.constant 0 : i32
    %c0_i32_0 = arith.constant 0 : i32
    return %arg0, %c0_i32 : i32, i32
  }
  func.func @transform_1(%arg0: i32) -> (i32, i32) {
    %c0_i32 = arith.constant 0 : i32
    %c0_i32_0 = arith.constant 0 : i32
    %c0_i32_1 = arith.constant 0 : i32
    return %c0_i32, %c0_i32_0 : i32, i32
  }
  func.func @transform_2(%arg0: i32) -> (i32, i32) {
    %c0_i32 = arith.constant 0 : i32
    %c0_i32_0 = arith.constant 0 : i32
    %c0_i32_1 = arith.constant 0 : i32
    return %c0_i32, %c0_i32_0 : i32, i32
  }
  func.func @transform_3(%arg0: i32) -> (i32, i32) {
    %c0_i32 = arith.constant 0 : i32
    %c0_i32_0 = arith.constant 0 : i32
    %c0_i32_1 = arith.constant 0 : i32
    return %c0_i32, %c0_i32_0 : i32, i32
  }
  func.func @transform_4(%arg0: i32) -> (i32, i32) {
    %c0_i32 = arith.constant 0 : i32
    %c0_i32_0 = arith.constant 0 : i32
    %c0_i32_1 = arith.constant 0 : i32
    return %c0_i32, %c0_i32_0 : i32, i32
  }
  func.func @transform_5(%arg0: i32) -> (i32, i32) {
    %c0_i32 = arith.constant 0 : i32
    %c0_i32_0 = arith.constant 0 : i32
    return %arg0, %c0_i32 : i32, i32
  }
}

</mosaic_0001>

<llo_original>
// kernel: cmnist_forward.1
$region0: #{cmnist_forward.1}
  #allocation0 [shape = 'u32[]', space=smem, size = 0x4, offset = 0x4, fixed_abs, tag = 'smem constant byte address 0x4 - core index']
  #allocation1 [shape = 'u32[144,128]{1,0:T(1,128)}', space=vmem, size = 0x12000, scoped, tag = 'internal scratch']
  %s0 = inlined_call_operand.vmem [shape: bf16[16,256], index: 0, kind: input, shape index: {}]
  %s1 = inlined_call_operand.vmem [shape: bf16[256,128], index: 1, kind: input, shape index: {}]
  %s2 = inlined_call_operand.vmem [shape: f32[1,128], index: 2, kind: input, shape index: {}]
  %s3 = inlined_call_operand.vmem [shape: bf16[128,128], index: 3, kind: input, shape index: {}]
  %s4 = inlined_call_operand.vmem [shape: f32[1,128], index: 4, kind: input, shape index: {}]
  %s5 = inlined_call_operand.vmem [shape: f32[16,128], index: 5, kind: output, shape index: {}]
  %s6 = sld [smem:[#allocation0]]
  $region30: #{cmnist_forward.1} parent=0
    _
  %s8 = ssub.s32 1, %s6
  %s9 = scalar_select 0, %s8, %s6
  // Predicated region
  $region2: #{cmnist_forward.1} parent=0 // pred_check
    _
  $region3: #{cmnist_forward.1} parent=0 // pred_check_branch
    %11 = sbr.rel (0) target = $region5
  $region4: #{cmnist_forward.1} parent=0 // pred_region
    _
  $region5: #{cmnist_forward.1} parent=0 // pred_fallthru
    _
  // Predicated region
  $region6: #{cmnist_forward.1} parent=0 // pred_check
    _
  $region7: #{cmnist_forward.1} parent=0 // pred_check_branch
    %13 = sbr.rel (0) target = $region9
  $region8: #{cmnist_forward.1} parent=0 // pred_region
    _
  $region9: #{cmnist_forward.1} parent=0 // pred_fallthru
    _
  // Predicated region
  $region10: #{cmnist_forward.1} parent=0 // pred_check
    _
  $region11: #{cmnist_forward.1} parent=0 // pred_check_branch
    %15 = sbr.rel (0) target = $region13
  $region12: #{cmnist_forward.1} parent=0 // pred_region
    _
  $region13: #{cmnist_forward.1} parent=0 // pred_fallthru
    _
  // Predicated region
  $region14: #{cmnist_forward.1} parent=0 // pred_check
    _
  $region15: #{cmnist_forward.1} parent=0 // pred_check_branch
    %17 = sbr.rel (0) target = $region17
  $region16: #{cmnist_forward.1} parent=0 // pred_region
    _
  $region17: #{cmnist_forward.1} parent=0 // pred_fallthru
    _
  // Predicated region
  $region18: #{cmnist_forward.1} parent=0 // pred_check
    _
  $region19: #{cmnist_forward.1} parent=0 // pred_check_branch
    %19 = sbr.rel (0) target = $region21
  $region20: #{cmnist_forward.1} parent=0 // pred_region
    _
  $region21: #{cmnist_forward.1} parent=0 // pred_fallthru
    _
  %v21 = vld [vmem:[%s0] sm:$0xff]
  %v22 = vld [vmem:[%s0 + $0x8] sm:$0xff]
  %v23 = vld [vmem:[%s1] sm:$0xf]
  %v24 = vld [vmem:[%s1 + $0x4] sm:$0xf]
  %v25 = vld [vmem:[%s1 + $0x8] sm:$0xf]
  %v26 = vld [vmem:[%s1 + $0xc] sm:$0xf]
  %v27 = vld [vmem:[%s1 + $0x10] sm:$0xf]
  %v28 = vld [vmem:[%s1 + $0x14] sm:$0xf]
  %v29 = vld [vmem:[%s1 + $0x18] sm:$0xf]
  %v30 = vld [vmem:[%s1 + $0x1c] sm:$0xf]
  %v31 = vld [vmem:[%s1 + $0x20] sm:$0xf]
  %v32 = vld [vmem:[%s1 + $0x24] sm:$0xf]
  %v33 = vld [vmem:[%s1 + $0x28] sm:$0xf]
  %v34 = vld [vmem:[%s1 + $0x2c] sm:$0xf]
  %v35 = vld [vmem:[%s1 + $0x30] sm:$0xf]
  %v36 = vld [vmem:[%s1 + $0x34] sm:$0xf]
  %v37 = vld [vmem:[%s1 + $0x38] sm:$0xf]
  %v38 = vld [vmem:[%s1 + $0x3c] sm:$0xf]
  %v39 = vld [vmem:[%s1 + $0x40] sm:$0xf]
  %v40 = vld [vmem:[%s1 + $0x44] sm:$0xf]
  %v41 = vld [vmem:[%s1 + $0x48] sm:$0xf]
  %v42 = vld [vmem:[%s1 + $0x4c] sm:$0xf]
  %v43 = vld [vmem:[%s1 + $0x50] sm:$0xf]
  %v44 = vld [vmem:[%s1 + $0x54] sm:$0xf]
  %v45 = vld [vmem:[%s1 + $0x58] sm:$0xf]
  %v46 = vld [vmem:[%s1 + $0x5c] sm:$0xf]
  %v47 = vld [vmem:[%s1 + $0x60] sm:$0xf]
  %v48 = vld [vmem:[%s1 + $0x64] sm:$0xf]
  %v49 = vld [vmem:[%s1 + $0x68] sm:$0xf]
  %v50 = vld [vmem:[%s1 + $0x6c] sm:$0xf]
  %v51 = vld [vmem:[%s1 + $0x70] sm:$0xf]
  %v52 = vld [vmem:[%s1 + $0x74] sm:$0xf]
  %v53 = vld [vmem:[%s1 + $0x78] sm:$0xf]
  %v54 = vld [vmem:[%s1 + $0x7c] sm:$0xf]
  %v55 = vld [vmem:[%s2] sm:$0x1]
  %v57 = vlaneseq
  %v58 = vshrl.u32 %v57, 7
  %v59 = vsub.s32 0, %v58
  %v60 = vrot.slane %v55, %v59
  %v64 = vunpack.c.l.b16 %v21
  %v65 = vunpack.c.h.b16 %v21
  %v66 = vunpack.c.l.b16 %v22
  %v67 = vunpack.c.h.b16 %v22
  %v68 = vpack.c.b16 %v66, %v64
  %v69 = vpack.c.b16 %v67, %v65
  %v104 = vunpack.c.l.b16 %v23
  %v105 = vunpack.c.l.b16 %v24
  %v106 = vunpack.c.l.b16 %v25
  %v107 = vunpack.c.l.b16 %v26
  %v108 = vunpack.c.l.b16 %v27
  %v109 = vunpack.c.l.b16 %v28
  %v110 = vunpack.c.l.b16 %v29
  %v111 = vunpack.c.l.b16 %v30
  %v112 = vunpack.c.l.b16 %v31
  %v113 = vunpack.c.l.b16 %v32
  %v114 = vunpack.c.l.b16 %v33
  %v115 = vunpack.c.l.b16 %v34
  %v116 = vunpack.c.l.b16 %v35
  %v117 = vunpack.c.l.b16 %v36
  %v118 = vunpack.c.l.b16 %v37
  %v119 = vunpack.c.l.b16 %v38
  %v120 = vunpack.c.l.b16 %v39
  %v121 = vunpack.c.l.b16 %v40
  %v122 = vunpack.c.l.b16 %v41
  %v123 = vunpack.c.l.b16 %v42
  %v124 = vunpack.c.l.b16 %v43
  %v125 = vunpack.c.l.b16 %v44
  %v126 = vunpack.c.l.b16 %v45
  %v127 = vunpack.c.l.b16 %v46
  %v128 = vunpack.c.l.b16 %v47
  %v129 = vunpack.c.l.b16 %v48
  %v130 = vunpack.c.l.b16 %v49
  %v131 = vunpack.c.l.b16 %v50
  %v132 = vunpack.c.l.b16 %v51
  %v133 = vunpack.c.l.b16 %v52
  %v134 = vunpack.c.l.b16 %v53
  %v135 = vunpack.c.l.b16 %v54
  %v136 = vpack.c.b16 %v105, %v104
  %v137 = vpack.c.b16 %v107, %v106
  %v138 = vpack.c.b16 %v109, %v108
  %v139 = vpack.c.b16 %v111, %v110
  %v140 = vpack.c.b16 %v113, %v112
  %v141 = vpack.c.b16 %v115, %v114
  %v142 = vpack.c.b16 %v117, %v116
  %v143 = vpack.c.b16 %v119, %v118
  %v144 = vpack.c.b16 %v121, %v120
  %v145 = vpack.c.b16 %v123, %v122
  %v146 = vpack.c.b16 %v125, %v124
  %v147 = vpack.c.b16 %v127, %v126
  %v148 = vpack.c.b16 %v129, %v128
  %v149 = vpack.c.b16 %v131, %v130
  %v150 = vpack.c.b16 %v133, %v132
  %v151 = vpack.c.b16 %v135, %v134
  %168 = vmatprep.subr.bf16.mxu0 0
  %169 = vmatpush1.bf16.msra.mxu0 %v136
  %170 = vmatprep.subr.bf16.mxu0 0
  %171 = vmatpush1.bf16.msra.mxu0 %v137
  %172 = vmatprep.subr.bf16.mxu0 0
  %173 = vmatpush1.bf16.msra.mxu0 %v138
  %174 = vmatprep.subr.bf16.mxu0 0
  %175 = vmatpush1.bf16.msra.mxu0 %v139
  %176 = vmatprep.subr.bf16.mxu0 0
  %177 = vmatpush1.bf16.msra.mxu0 %v140
  %178 = vmatprep.subr.bf16.mxu0 0
  %179 = vmatpush1.bf16.msra.mxu0 %v141
  %180 = vmatprep.subr.bf16.mxu0 0
  %181 = vmatpush1.bf16.msra.mxu0 %v142
  %182 = vmatprep.subr.bf16.mxu0 0
  %183 = vmatpush1.bf16.msra.mxu0 %v143
  %184 = vmatprep.subr.bf16.mxu0 0
  %185 = vmatpush1.bf16.msra.mxu0 %v144
  %186 = vmatprep.subr.bf16.mxu0 0
  %187 = vmatpush1.bf16.msra.mxu0 %v145
  %188 = vmatprep.subr.bf16.mxu0 0
  %189 = vmatpush1.bf16.msra.mxu0 %v146
  %190 = vmatprep.subr.bf16.mxu0 0
  %191 = vmatpush1.bf16.msra.mxu0 %v147
  %192 = vmatprep.subr.bf16.mxu0 0
  %193 = vmatpush1.bf16.msra.mxu0 %v148
  %194 = vmatprep.subr.bf16.mxu0 0
  %195 = vmatpush1.bf16.msra.mxu0 %v149
  %196 = vmatprep.subr.bf16.mxu0 0
  %197 = vmatpush1.bf16.msra.mxu0 %v150
  %198 = vmatprep.subr.bf16.mxu0 0
  %199 = vmatpush1.bf16.msra.mxu0 %v151
  %200 = vmatprep.mubr.bf16.mxu0 %v69
  %201 = vmatmul.mubr.bf16.gmra.mrb[0].mxu0 %v68
  %v202 = vpop.f32.mrb[0].mxu0
  %v203 = vadd.f32 %v60, %v202
  %v204 = vpop.f32.mrb[0].mxu0
  %v205 = vpop.f32.mrb[0].mxu0
  %v206 = vadd.f32 %v60, %v205
  %v207 = vpop.f32.mrb[0].mxu0
  %208 = vdwg.mxu0
  %v209 = vmax.f32 %v203, 0.0
  %v210 = vmax.f32 %v206, 0.0
  %v211 = vpack.c.bf16 %v210, %v209
  %v212 = vld [vmem:[%s3] sm:$0xf]
  %v213 = vld [vmem:[%s3 + $0x4] sm:$0xf]
  %v214 = vld [vmem:[%s3 + $0x8] sm:$0xf]
  %v215 = vld [vmem:[%s3 + $0xc] sm:$0xf]
  %v216 = vld [vmem:[%s3 + $0x10] sm:$0xf]
  %v217 = vld [vmem:[%s3 + $0x14] sm:$0xf]
  %v218 = vld [vmem:[%s3 + $0x18] sm:$0xf]
  %v219 = vld [vmem:[%s3 + $0x1c] sm:$0xf]
  %v220 = vld [vmem:[%s3 + $0x20] sm:$0xf]
  %v221 = vld [vmem:[%s3 + $0x24] sm:$0xf]
  %v222 = vld [vmem:[%s3 + $0x28] sm:$0xf]
  %v223 = vld [vmem:[%s3 + $0x2c] sm:$0xf]
  %v224 = vld [vmem:[%s3 + $0x30] sm:$0xf]
  %v225 = vld [vmem:[%s3 + $0x34] sm:$0xf]
  %v226 = vld [vmem:[%s3 + $0x38] sm:$0xf]
  %v227 = vld [vmem:[%s3 + $0x3c] sm:$0xf]
  %v228 = vld [vmem:[%s4] sm:$0x1]
  %v230 = vlaneseq
  %v231 = vshrl.u32 %v230, 7
  %v232 = vsub.s32 0, %v231
  %v233 = vrot.slane %v228, %v232
  %v251 = vunpack.c.l.b16 %v212
  %v252 = vunpack.c.l.b16 %v213
  %v253 = vunpack.c.l.b16 %v214
  %v254 = vunpack.c.l.b16 %v215
  %v255 = vunpack.c.l.b16 %v216
  %v256 = vunpack.c.l.b16 %v217
  %v257 = vunpack.c.l.b16 %v218
  %v258 = vunpack.c.l.b16 %v219
  %v259 = vunpack.c.l.b16 %v220
  %v260 = vunpack.c.l.b16 %v221
  %v261 = vunpack.c.l.b16 %v222
  %v262 = vunpack.c.l.b16 %v223
  %v263 = vunpack.c.l.b16 %v224
  %v264 = vunpack.c.l.b16 %v225
  %v265 = vunpack.c.l.b16 %v226
  %v266 = vunpack.c.l.b16 %v227
  %v267 = vpack.c.b16 %v252, %v251
  %v268 = vpack.c.b16 %v254, %v253
  %v269 = vpack.c.b16 %v256, %v255
  %v270 = vpack.c.b16 %v258, %v257
  %v271 = vpack.c.b16 %v260, %v259
  %v272 = vpack.c.b16 %v262, %v261
  %v273 = vpack.c.b16 %v264, %v263
  %v274 = vpack.c.b16 %v266, %v265
  %283 = vmatprep.subr.bf16.mxu0 0
  %284 = vmatpush1.bf16.msra.mxu0 %v267
  %285 = vmatprep.subr.bf16.mxu0 0
  %286 = vmatpush1.bf16.msra.mxu0 %v268
  %287 = vmatprep.subr.bf16.mxu0 0
  %288 = vmatpush1.bf16.msra.mxu0 %v269
  %289 = vmatprep.subr.bf16.mxu0 0
  %290 = vmatpush1.bf16.msra.mxu0 %v270
  %291 = vmatprep.subr.bf16.mxu0 0
  %292 = vmatpush1.bf16.msra.mxu0 %v271
  %293 = vmatprep.subr.bf16.mxu0 0
  %294 = vmatpush1.bf16.msra.mxu0 %v272
  %295 = vmatprep.subr.bf16.mxu0 0
  %296 = vmatpush1.bf16.msra.mxu0 %v273
  %297 = vmatprep.subr.bf16.mxu0 0
  %298 = vmatpush1.bf16.msra.mxu0 %v274
  %299 = vmatprep.subr.bf16.mxu0 0
  %300 = vmatpush1.bf16.msra.mxu0 0
  %301 = vmatprep.subr.bf16.mxu0 0
  %302 = vmatpush1.bf16.msra.mxu0 0
  %303 = vmatprep.subr.bf16.mxu0 0
  %304 = vmatpush1.bf16.msra.mxu0 0
  %305 = vmatprep.subr.bf16.mxu0 0
  %306 = vmatpush1.bf16.msra.mxu0 0
  %307 = vmatprep.subr.bf16.mxu0 0
  %308 = vmatpush1.bf16.msra.mxu0 0
  %309 = vmatprep.subr.bf16.mxu0 0
  %310 = vmatpush1.bf16.msra.mxu0 0
  %311 = vmatprep.subr.bf16.mxu0 0
  %312 = vmatpush1.bf16.msra.mxu0 0
  %313 = vmatprep.subr.bf16.mxu0 0
  %314 = vmatpush1.bf16.msra.mxu0 0
  %315 = vmatprep.mubr.bf16.mxu0 0
  %316 = vmatmul.mubr.bf16.gmra.mrb[0].mxu0 %v211
  %v317 = vpop.f32.mrb[0].mxu0
  %v318 = vadd.f32 %v233, %v317
  %v319 = vpop.f32.mrb[0].mxu0
  %v320 = vpop.f32.mrb[0].mxu0
  %v321 = vadd.f32 %v233, %v320
  %v322 = vpop.f32.mrb[0].mxu0
  %323 = vdwg.mxu0
  %324 = vst [vmem:[%s5] sm:$0xff] %v318
  %325 = vst [vmem:[%s5 + $0x8] sm:$0xff] %v321
  // Predicated region
  $region22: #{cmnist_forward.1} parent=0 // pred_check
    _
  $region23: #{cmnist_forward.1} parent=0 // pred_check_branch
    %327 = sbr.rel (0) target = $region25
  $region24: #{cmnist_forward.1} parent=0 // pred_region
    _
  $region25: #{cmnist_forward.1} parent=0 // pred_fallthru
    _
  // Predicated region
  $region26: #{cmnist_forward.1} parent=0 // pred_check
    _
  $region27: #{cmnist_forward.1} parent=0 // pred_check_branch
    %329 = sbr.rel (0) target = $region29
  $region28: #{cmnist_forward.1} parent=0 // pred_region
    _
  $region29: #{cmnist_forward.1} parent=0 // pred_fallthru
    _

</llo_original>
